<compile_context>
chip_gen: v6e
topology: v6e:2x2x1
jax: 0.10.0
libtpu: 0.0.40
codegen_flags: <defaults>
</compile_context>

<pallas_src>
import functools

import jax
import jax.numpy as jnp
from jax import lax
from jax.experimental import pallas as pl
from jax.experimental.pallas import tpu as pltpu


# ---------------------------------------------------------------------------
# Pallas kernel: one batch *tile* per grid step.
#   x_ref   : [B_TILE, C, HW]    raw input pixels (any dtype), lane-dense HW
#   w1t_ref : [F, C]             1x1 conv weight, transposed (out-features 1st)
#   wxy_ref : [F, KX+KY]         fused SimCC head weight (wx | wy concatenated)
#   out_ref : [B_TILE, KX+KY]
# ---------------------------------------------------------------------------
def _engine_kernel(x_ref, w1t_ref, wxy_ref, out_ref, *, inv_hw, hw_tile):
    b_tile, c_in, hw = x_ref.shape
    f_out = w1t_ref.shape[0]

    # Hoisted once per grid step (NOT inside the pixel loop): JAX does not CSE
    # broadcast_in_dim, so the per-channel column broadcasts live here.
    w = w1t_ref[...]                                         # [F, C]
    w_cols = [w[:, c:c + 1].reshape(1, f_out, 1) for c in range(c_in)]

    def chunk_pooled(x_chunk):
        """[B, C, P] raw pixels -> partial pooled sums [B, F] (f32)."""
        xf = x_chunk.astype(jnp.float32)          # in-kernel cast (VPU, free)
        # 1x1 pointwise conv on the VPU: feat[b,f,p] = sum_c w[f,c] * x[b,c,p]
        # (C is tiny; an MXU matmul would be <3% utilized and the VPU MAC
        #  hides under the DMA slack on this memory-bound kernel.)
        feat = w_cols[0] * xf[:, 0:1, :]                     # [B, F, P]
        for c in range(1, c_in):                             # static, small C
            feat = feat + w_cols[c] * xf[:, c:c + 1, :]
        feat = jnp.maximum(feat, 0.0)                        # ReLU
        # Cross-lane (XLU) reduce over the pixel axis of this chunk only.
        return jnp.sum(feat, axis=-1)                        # [B, F]

    num_full = hw // hw_tile
    rem = hw - num_full * hw_tile

    pooled = jnp.zeros((b_tile, f_out), jnp.float32)
    if num_full > 0:
        def body(t, acc):
            start = pl.multiple_of(t * hw_tile, hw_tile)
            return acc + chunk_pooled(x_ref[:, :, pl.ds(start, hw_tile)])
        pooled = lax.fori_loop(0, num_full, body, pooled,
                               unroll=(num_full <= 4))
    if rem > 0:                                              # static tail chunk
        pooled = pooled + chunk_pooled(x_ref[:, :, pl.ds(num_full * hw_tile, rem)])

    pooled = pooled * inv_hw                                 # global avg pool

    # Fused SimCC heads on the MXU: [B_TILE, F] @ [F, KX+KY] -> one lane-dense
    # 512-wide, sublane-dense store per grid step (no per-image XLU reduce).
    out = jnp.dot(pooled, wxy_ref[...], preferred_element_type=jnp.float32)
    out_ref[...] = out.astype(out_ref.dtype)


# ---------------------------------------------------------------------------
# Tile sizing
# ---------------------------------------------------------------------------
def _pick_hw_tile(hw, max_tile=4096):
    """Pixel-chunk size: full HW when small, else a 128-multiple <= max_tile
    (remainder handled by a static tail chunk inside the kernel)."""
    if hw <= max_tile:
        return hw
    return (max_tile // 128) * 128


def _pick_b_tile(n, c, hw, itemsize, budget_bytes=12 * 1024 * 1024):
    """Batch tile: full batch when N < 8 (block dim == array dim keeps the
    (8,128) rule), otherwise a multiple of 8 sized so the double-buffered
    input block fits the VMEM budget and >=2 grid steps remain (v7x megacore)."""
    if n < 8:
        return n
    b = 8
    while (b * 2 <= n // 2
           and 2 * (b * 2) * c * hw * itemsize <= budget_bytes):
        b *= 2
    return b


def _run_engine(x_chw, w1t, wxy, *, hw):
    """grid = (cdiv(N, B_TILE),); each step handles a [B_TILE, C, HW] slab."""
    N, C, HW = x_chw.shape
    F, KXY = wxy.shape
    itemsize = x_chw.dtype.itemsize

    hw_tile = _pick_hw_tile(HW)
    b_tile = _pick_b_tile(N, C, HW, itemsize)
    grid = (pl.cdiv(N, b_tile),)

    kernel = functools.partial(_engine_kernel,
                               inv_hw=1.0 / float(hw), hw_tile=hw_tile)

    # Rough VMEM need: double-buffered input block + resident weights +
    # one feat chunk + double-buffered output block.  Only raise the scoped
    # limit when the default would be exceeded.
    vmem_need = (2 * b_tile * C * HW * itemsize
                 + (F * C + F * KXY) * 4
                 + b_tile * F * hw_tile * 4
                 + 2 * b_tile * KXY * 4)
    vmem_limit = None
    if vmem_need > 12 * 1024 * 1024:
        vmem_limit = int(min(100 * 1024 * 1024, 2 * vmem_need))

    cost = pl.CostEstimate(
        flops=2 * N * F * HW * C + 2 * N * F * KXY,
        transcendentals=0,
        bytes_accessed=(N * C * HW * itemsize
                        + (F * C + F * KXY) * 4
                        + N * KXY * 4),
    )

    return pl.pallas_call(
        kernel,
        grid=grid,
        in_specs=[
            pl.BlockSpec((b_tile, C, HW), lambda i: (i, 0, 0)),   # batch tile
            pl.BlockSpec((F, C), lambda i: (0, 0)),               # conv weight
            pl.BlockSpec((F, KXY), lambda i: (0, 0)),             # fused head
        ],
        out_specs=pl.BlockSpec((b_tile, KXY), lambda i: (i, 0)),
        out_shape=jax.ShapeDtypeStruct((N, KXY), jnp.float32),
        compiler_params=pltpu.CompilerParams(
            dimension_semantics=("parallel",),       # batch tiles independent
            vmem_limit_bytes=vmem_limit),
        cost_estimate=cost,
    )(x_chw, w1t, wxy)


# ---------------------------------------------------------------------------
# Wrapper mirroring TRTWrapper: dict-of-tensors in, dict of float32 out.
# ---------------------------------------------------------------------------
class TRTWrapperPallas:
    def __init__(self, in_channels=4, feat_channels=32, num_keypoints=8,
                 simcc_x_bins=32, simcc_y_bins=32, seed=0):
        self._input_names = ["input"]
        self._output_names = ["simcc_x", "simcc_y"]
        self.num_keypoints = num_keypoints
        self.simcc_x_bins = simcc_x_bins
        self.simcc_y_bins = simcc_y_bins

        key = jax.random.PRNGKey(seed)
        k1, k2, k3 = jax.random.split(key, 3)
        # Deterministic synthetic "engine" weights.
        w1 = jax.random.normal(k1, (in_channels, feat_channels),
                               dtype=jnp.float32) * 0.1
        wx = jax.random.normal(k2, (feat_channels,
                                    num_keypoints * simcc_x_bins),
                               dtype=jnp.float32) * 0.1
        wy = jax.random.normal(k3, (feat_channels,
                                    num_keypoints * simcc_y_bins),
                               dtype=jnp.float32) * 0.1
        # Hoisted out of the per-call path: transpose + head fusion done once.
        self.w1t = jnp.transpose(w1)                   # [F, C]
        self.wxy = jnp.concatenate([wx, wy], axis=1)   # [F, KX + KY]

    def __call__(self, inputs):
        assert self._input_names is not None
        assert self._output_names is not None
        x = inputs["input"]                       # NCHW (TRT binding layout)
        if x.dtype == jnp.int64:                  # TRT: long -> int cast
            x = x.astype(jnp.int32)
        # NOTE: no f32 cast here — done inside the kernel to avoid a full
        # materialized HBM copy of the input (kernel is memory-bound).

        N, C, H, W = x.shape
        # NCHW -> [N, C, H*W]: free reshape, keeps the pixel axis lane-dense.
        x_chw = x.reshape(N, C, H * W)

        out = _run_engine(x_chw, self.w1t, self.wxy, hw=H * W)   # [N, KX+KY]

        kx = self.num_keypoints * self.simcc_x_bins
        return {
            "simcc_x": out[:, :kx].reshape(
                N, self.num_keypoints, self.simcc_x_bins),
            "simcc_y": out[:, kx:].reshape(
                N, self.num_keypoints, self.simcc_y_bins),
        }


# ---------------------------------------------------------------------------
# Self-test
# ---------------------------------------------------------------------------
def _reference(model, x_f32):
    """Pure-JAX reference for the synthetic engine."""
    N, C, H, W = x_f32.shape
    x_flat = x_f32.reshape(N, C, H * W)
    feat = jnp.maximum(jnp.einsum("fc,ncp->nfp", model.w1t, x_flat), 0.0)
    pooled = feat.mean(axis=-1)                        # [N, F]
    return pooled @ model.wxy                          # [N, KX+KY]


if __name__ == "__main__":
    key = jax.random.PRNGKey(0)
    # Small shapes consistent with an NCHW image input binding.
    N, C, H, W = 2, 4, 16, 16
    x = jax.random.normal(key, (N, C, H, W), dtype=jnp.float32)

    model = TRTWrapperPallas(in_channels=C, feat_channels=32,
                             num_keypoints=8, simcc_x_bins=32,
                             simcc_y_bins=32, seed=0)

    # float32 input path
    outs = model({"input": x})
    jax.block_until_ready(outs)

    assert outs["simcc_x"].shape == (N, 8, 32)
    assert outs["simcc_y"].shape == (N, 8, 32)
    assert outs["simcc_x"].dtype == jnp.float32
    assert outs["simcc_y"].dtype == jnp.float32

    got = jnp.concatenate(
        [outs["simcc_x"].reshape(N, -1), outs["simcc_y"].reshape(N, -1)],
        axis=1)
    want = _reference(model, x)
    assert jnp.allclose(got, want, rtol=1e-3, atol=1e-3), "f32 mismatch vs ref"

    # int input path (cast happens inside the kernel)
    x_int = jnp.round(x * 10.0).astype(jnp.int32)
    outs_i = model({"input": x_int})
    jax.block_until_ready(outs_i)
    got_i = jnp.concatenate(
        [outs_i["simcc_x"].reshape(N, -1), outs_i["simcc_y"].reshape(N, -1)],
        axis=1)
    want_i = _reference(model, x_int.astype(jnp.float32))
    assert jnp.allclose(got_i, want_i, rtol=1e-3, atol=1e-3), "int mismatch vs ref"

    print("KERNEL_OK")
</pallas_src>

<mosaic_0001>
module attributes {stable_mosaic.version = 11 : i64} {
  func.func @_engine_kernel(%arg0: i32, %arg1: memref<2x4x256xf32, #tpu.memory_space<vmem>>, %arg2: memref<32x4xf32, #tpu.memory_space<vmem>>, %arg3: memref<32x512xf32, #tpu.memory_space<vmem>>, %arg4: memref<2x512xf32, #tpu.memory_space<vmem>>) attributes {dimension_semantics = [#tpu.dimension_semantics<parallel>], iteration_bounds = array<i64: 1>, scalar_prefetch = 0 : i64, scratch_operands = 0 : i64, tpu.core_type = #tpu.core_type<tc>, window_params = [{transform_indices = @transform_0, window_bounds = array<i64: 2, 4, 256>}, {pipeline_mode = #tpu.pipeline_mode<synchronous>, transform_indices = @transform_1, window_bounds = array<i64: 32, 4>}, {pipeline_mode = #tpu.pipeline_mode<synchronous>, transform_indices = @transform_2, window_bounds = array<i64: 32, 512>}, {transform_indices = @transform_3, window_bounds = array<i64: 2, 512>}]} {
    %c0 = arith.constant 0 : index
    %c0_0 = arith.constant 0 : index
    %0 = vector.load %arg2[%c0, %c0_0] : memref<32x4xf32, #tpu.memory_space<vmem>>, vector<32x4xf32>
    %1 = vector.extract_strided_slice %0 {offsets = [0, 0], sizes = [32, 1], strides = [1, 1]} : vector<32x4xf32> to vector<32x1xf32>
    %2 = vector.shape_cast %1 : vector<32x1xf32> to vector<1x32x1xf32>
    %3 = vector.extract_strided_slice %0 {offsets = [0, 1], sizes = [32, 1], strides = [1, 1]} : vector<32x4xf32> to vector<32x1xf32>
    %4 = vector.shape_cast %3 : vector<32x1xf32> to vector<1x32x1xf32>
    %5 = vector.extract_strided_slice %0 {offsets = [0, 2], sizes = [32, 1], strides = [1, 1]} : vector<32x4xf32> to vector<32x1xf32>
    %6 = vector.shape_cast %5 : vector<32x1xf32> to vector<1x32x1xf32>
    %7 = vector.extract_strided_slice %0 {offsets = [0, 3], sizes = [32, 1], strides = [1, 1]} : vector<32x4xf32> to vector<32x1xf32>
    %8 = vector.shape_cast %7 : vector<32x1xf32> to vector<1x32x1xf32>
    %cst = arith.constant 0.000000e+00 : f32
    %9 = vector.broadcast %cst : f32 to vector<2x32xf32>
    %c0_i32 = arith.constant 0 : i32
    %c256_i32 = arith.constant 256 : i32
    %10 = arith.muli %c0_i32, %c256_i32 : i32
    %11 = tpu.assume_multiple %10, 256 : i32
    %c0_1 = arith.constant 0 : index
    %c0_2 = arith.constant 0 : index
    %12 = arith.index_cast %11 : i32 to index
    %13 = vector.load %arg1[%c0_1, %c0_2, %12] : memref<2x4x256xf32, #tpu.memory_space<vmem>>, vector<2x4x256xf32>
    %14 = vector.extract_strided_slice %13 {offsets = [0, 0, 0], sizes = [2, 1, 256], strides = [1, 1, 1]} : vector<2x4x256xf32> to vector<2x1x256xf32>
    %15 = vector.broadcast %2 : vector<1x32x1xf32> to vector<2x32x256xf32>
    %16 = vector.broadcast %14 : vector<2x1x256xf32> to vector<2x32x256xf32>
    %17 = arith.mulf %15, %16 : vector<2x32x256xf32>
    %18 = vector.extract_strided_slice %13 {offsets = [0, 1, 0], sizes = [2, 1, 256], strides = [1, 1, 1]} : vector<2x4x256xf32> to vector<2x1x256xf32>
    %19 = vector.broadcast %4 : vector<1x32x1xf32> to vector<2x32x256xf32>
    %20 = vector.broadcast %18 : vector<2x1x256xf32> to vector<2x32x256xf32>
    %21 = arith.mulf %19, %20 : vector<2x32x256xf32>
    %22 = arith.addf %17, %21 : vector<2x32x256xf32>
    %23 = vector.extract_strided_slice %13 {offsets = [0, 2, 0], sizes = [2, 1, 256], strides = [1, 1, 1]} : vector<2x4x256xf32> to vector<2x1x256xf32>
    %24 = vector.broadcast %6 : vector<1x32x1xf32> to vector<2x32x256xf32>
    %25 = vector.broadcast %23 : vector<2x1x256xf32> to vector<2x32x256xf32>
    %26 = arith.mulf %24, %25 : vector<2x32x256xf32>
    %27 = arith.addf %22, %26 : vector<2x32x256xf32>
    %28 = vector.extract_strided_slice %13 {offsets = [0, 3, 0], sizes = [2, 1, 256], strides = [1, 1, 1]} : vector<2x4x256xf32> to vector<2x1x256xf32>
    %29 = vector.broadcast %8 : vector<1x32x1xf32> to vector<2x32x256xf32>
    %30 = vector.broadcast %28 : vector<2x1x256xf32> to vector<2x32x256xf32>
    %31 = arith.mulf %29, %30 : vector<2x32x256xf32>
    %32 = arith.addf %27, %31 : vector<2x32x256xf32>
    %cst_3 = arith.constant 0.000000e+00 : f32
    %33 = vector.broadcast %cst_3 : f32 to vector<2x32x256xf32>
    %34 = arith.maximumf %32, %33 : vector<2x32x256xf32>
    %cst_4 = arith.constant dense<0.000000e+00> : vector<2x32xf32>
    %35 = vector.multi_reduction <add>, %34, %cst_4 [2] : vector<2x32x256xf32> to vector<2x32xf32>
    %36 = arith.addf %9, %35 : vector<2x32xf32>
    %c1_i32 = arith.constant 1 : i32
    %cst_5 = arith.constant 3.906250e-03 : f32
    %37 = vector.broadcast %cst_5 : f32 to vector<2x32xf32>
    %38 = arith.mulf %36, %37 : vector<2x32xf32>
    %c0_6 = arith.constant 0 : index
    %c0_7 = arith.constant 0 : index
    %39 = vector.load %arg3[%c0_6, %c0_7] : memref<32x512xf32, #tpu.memory_space<vmem>>, vector<32x512xf32>
    %cst_8 = arith.constant dense<0.000000e+00> : vector<2x512xf32>
    %40 = tpu.matmul %38, %39, %cst_8 {dimension_numbers = #tpu.dot_dimension_numbers<[1], [0], [0], [1], [0, 0, 1, 1], [], []>} : vector<2x32xf32>, vector<32x512xf32>, vector<2x512xf32> -> vector<2x512xf32>
    %c0_9 = arith.constant 0 : index
    %c0_10 = arith.constant 0 : index
    %41 = vector.load %arg4[%c0_9, %c0_10] : memref<2x512xf32, #tpu.memory_space<vmem>>, vector<2x512xf32>
    tpu.vector_store %arg4[%c0_9, %c0_10], %40 {strides = array<i32>} : memref<2x512xf32, #tpu.memory_space<vmem>>, vector<2x512xf32>,
    return
  }
  func.func @transform_0(%arg0: i32) -> (i32, i32, i32) {
    %c0_i32 = arith.constant 0 : i32
    %c0_i32_0 = arith.constant 0 : i32
    %c0_i32_1 = arith.constant 0 : i32
    return %arg0, %c0_i32, %c0_i32_0 : i32, i32, i32
  }
  func.func @transform_1(%arg0: i32) -> (i32, i32) {
    %c0_i32 = arith.constant 0 : i32
    %c0_i32_0 = arith.constant 0 : i32
    %c0_i32_1 = arith.constant 0 : i32
    return %c0_i32, %c0_i32_0 : i32, i32
  }
  func.func @transform_2(%arg0: i32) -> (i32, i32) {
    %c0_i32 = arith.constant 0 : i32
    %c0_i32_0 = arith.constant 0 : i32
    %c0_i32_1 = arith.constant 0 : i32
    return %c0_i32, %c0_i32_0 : i32, i32
  }
  func.func @transform_3(%arg0: i32) -> (i32, i32) {
    %c0_i32 = arith.constant 0 : i32
    %c0_i32_0 = arith.constant 0 : i32
    return %arg0, %c0_i32 : i32, i32
  }
}

</mosaic_0001>

<llo_original>
// kernel: tpu_custom_call.1
$region0: #{tpu_custom_call.1}
  #allocation0 [shape = 'u32[]', space=smem, size = 0x4, offset = 0x4, fixed_abs, tag = 'smem constant byte address 0x4 - core index']
  #allocation1 [shape = 'u32[144,128]{1,0:T(1,128)}', space=vmem, size = 0x12000, scoped, tag = 'internal scratch']
  %s0 = inlined_call_operand.vmem [shape: f32[2,4,256], index: 0, kind: input, shape index: {}]
  %s1 = inlined_call_operand.vmem [shape: f32[32,4], index: 1, kind: input, shape index: {}]
  %s2 = inlined_call_operand.hbm [shape: f32[32,512], index: 2, kind: input, shape index: {}]
  %s3 = inlined_call_operand.hbm [shape: f32[2,512], index: 3, kind: output, shape index: {}]
  %s4 = sld [smem:[#allocation0]]
  $region26: #{tpu_custom_call.1} parent=0
    _
  %s6 = ssub.s32 1, %s4
  %s7 = scalar_select 0, %s6, %s4
  $region1: #{tpu_custom_call.1} parent=0
    #allocation2 [shape = 'u8[65536]{0}', space=vmem, size = 0x10000, scoped, tag = 'input window, operand 2, single buffered']
    #allocation3 [shape = 's32[1]{0}', space=sflag, size = 0x4, scoped, tag = 'scoped memory for tpu_custom_call.1']
    #allocation4 [shape = 's32[1]{0}', space=sflag, size = 0x4, scoped, tag = 'scoped memory for tpu_custom_call.1']
    #allocation5 [shape = 'u8[4096]{0}', space=vmem, size = 0x1000, scoped, tag = 'output window, operand 0, single buffered']
    %8 = vsyncpa [#allocation3], 0
    %9 = vsyncpa [#allocation4], 0
    // Predicated region
    $region2: #{tpu_custom_call.1} parent=1 // pred_check
      _
    $region3: #{tpu_custom_call.1} parent=1 // pred_check_branch
      %11 = sbr.rel (0) target = $region5
    $region4: #{tpu_custom_call.1} parent=1 // pred_region
      _
    $region5: #{tpu_custom_call.1} parent=1 // pred_fallthru
      _
    // Predicated region
    $region6: #{tpu_custom_call.1} parent=1 // pred_check
      _
    $region7: #{tpu_custom_call.1} parent=1 // pred_check_branch
      %13 = sbr.rel (0) target = $region9
    $region8: #{tpu_custom_call.1} parent=1 // pred_region
      _
    $region9: #{tpu_custom_call.1} parent=1 // pred_fallthru
      _
    // Predicated region
    $region10: #{tpu_custom_call.1} parent=1 // pred_check
      _
    $region11: #{tpu_custom_call.1} parent=1 // pred_check_branch
      %15 = sbr.rel (0) target = $region13
    $region12: #{tpu_custom_call.1} parent=1 // pred_region
      %s17 = ssub.s32 2048, 2048
      %18 = vsyncadd [#allocation3], %s17
      %s19 = sshll.u32 [#allocation2], 4
      %s20 = int_to_ptr.vmem [resolvable:$true] %s19
      %25 = dma.hbm_to_vmem [thread:$0]  %s2, 2048, %s20, [#allocation3], 512, 512, 32
    $region13: #{tpu_custom_call.1} parent=1 // pred_fallthru
      _
    // Predicated region
    $region14: #{tpu_custom_call.1} parent=1 // pred_check
      _
    $region15: #{tpu_custom_call.1} parent=1 // pred_check_branch
      %27 = sbr.rel (0) target = $region17
    $region16: #{tpu_custom_call.1} parent=1 // pred_region
      %28 = dma.done [#allocation3], 2048
    $region17: #{tpu_custom_call.1} parent=1 // pred_fallthru
      _
    %v29 = vld [vmem:[%s1] sm:$0xff]
    %v30 = vld [vmem:[%s1 + $0x8] sm:$0xff]
    %v31 = vld [vmem:[%s1 + $0x10] sm:$0xff]
    %v32 = vld [vmem:[%s1 + $0x18] sm:$0xff]
    %v33 = vld [vmem:[%s0] sm:$0xff]
    %v34 = vld [vmem:[%s0 + $0x8] sm:$0xff]
    %36 = vset.pattern.permute.xlu0 0
    %37 = vperm.xlu0 %36, %v29
    %v38 = vpop.permute.xlu0 %37
    %41 = vset.pattern.permute.xlu0 0
    %42 = vperm.xlu0 %41, %v30
    %v43 = vpop.permute.xlu0 %42
    %46 = vset.pattern.permute.xlu0 0
    %47 = vperm.xlu0 %46, %v31
    %v48 = vpop.permute.xlu0 %47
    %51 = vset.pattern.permute.xlu0 0
    %52 = vperm.xlu0 %51, %v32
    %v53 = vpop.permute.xlu0 %52
    %v57 = vlaneseq
    %v58 = vshrl.u32 %v57, 7
    %v59 = vsub.s32 0, %v58
    %v60 = vrot.slane %v33, %v59
    %v61 = vlaneseq
    %v62 = vshrl.u32 %v61, 7
    %v63 = vsub.s32 4, %v62
    %v64 = vrot.slane %v33, %v63
    %v65 = vlaneseq
    %v66 = vshrl.u32 %v65, 7
    %v67 = vsub.s32 0, %v66
    %v68 = vrot.slane %v34, %v67
    %v69 = vlaneseq
    %v70 = vshrl.u32 %v69, 7
    %v71 = vsub.s32 4, %v70
    %v72 = vrot.slane %v34, %v71
    %v77 = vlaneseq
    %v78 = vshrl.u32 %v77, 7
    %v79 = vsub.s32 0, %v78
    %v80 = vrot.slane %v60, %v79
    %v81 = vlaneseq
    %v82 = vshrl.u32 %v81, 7
    %v83 = vsub.s32 0, %v82
    %v84 = vrot.slane %v64, %v83
    %v85 = vlaneseq
    %v86 = vshrl.u32 %v85, 7
    %v87 = vsub.s32 0, %v86
    %v88 = vrot.slane %v68, %v87
    %v89 = vlaneseq
    %v90 = vshrl.u32 %v89, 7
    %v91 = vsub.s32 0, %v90
    %v92 = vrot.slane %v72, %v91
    %v93 = vmul.f32 %v38, %v80
    %v94 = vmul.f32 %v38, %v84
    %v95 = vmul.f32 %v43, %v80
    %v96 = vmul.f32 %v43, %v84
    %v97 = vmul.f32 %v48, %v80
    %v98 = vmul.f32 %v48, %v84
    %v99 = vmul.f32 %v53, %v80
    %v100 = vmul.f32 %v53, %v84
    %v101 = vmul.f32 %v38, %v88
    %v102 = vmul.f32 %v38, %v92
    %v103 = vmul.f32 %v43, %v88
    %v104 = vmul.f32 %v43, %v92
    %v105 = vmul.f32 %v48, %v88
    %v106 = vmul.f32 %v48, %v92
    %v107 = vmul.f32 %v53, %v88
    %v108 = vmul.f32 %v53, %v92
    %109 = vset.pattern.permute.xlu0 1
    %110 = vperm.xlu0 %109, %v29
    %v111 = vpop.permute.xlu0 %110
    %113 = vset.pattern.permute.xlu0 1
    %114 = vperm.xlu0 %113, %v30
    %v115 = vpop.permute.xlu0 %114
    %117 = vset.pattern.permute.xlu0 1
    %118 = vperm.xlu0 %117, %v31
    %v119 = vpop.permute.xlu0 %118
    %121 = vset.pattern.permute.xlu0 1
    %122 = vperm.xlu0 %121, %v32
    %v123 = vpop.permute.xlu0 %122
    %v125 = vlaneseq
    %v126 = vshrl.u32 %v125, 7
    %v127 = vsub.s32 1, %v126
    %v128 = vrot.slane %v33, %v127
    %v129 = vlaneseq
    %v130 = vshrl.u32 %v129, 7
    %v131 = vsub.s32 5, %v130
    %v132 = vrot.slane %v33, %v131
    %v133 = vlaneseq
    %v134 = vshrl.u32 %v133, 7
    %v135 = vsub.s32 1, %v134
    %v136 = vrot.slane %v34, %v135
    %v137 = vlaneseq
    %v138 = vshrl.u32 %v137, 7
    %v139 = vsub.s32 5, %v138
    %v140 = vrot.slane %v34, %v139
    %v145 = vlaneseq
    %v146 = vshrl.u32 %v145, 7
    %v147 = vsub.s32 1, %v146
    %v148 = vrot.slane %v128, %v147
    %v149 = vlaneseq
    %v150 = vshrl.u32 %v149, 7
    %v151 = vsub.s32 1, %v150
    %v152 = vrot.slane %v132, %v151
    %v153 = vlaneseq
    %v154 = vshrl.u32 %v153, 7
    %v155 = vsub.s32 1, %v154
    %v156 = vrot.slane %v136, %v155
    %v157 = vlaneseq
    %v158 = vshrl.u32 %v157, 7
    %v159 = vsub.s32 1, %v158
    %v160 = vrot.slane %v140, %v159
    %v161 = vmul.f32 %v111, %v148
    %v162 = vmul.f32 %v111, %v152
    %v163 = vmul.f32 %v115, %v148
    %v164 = vmul.f32 %v115, %v152
    %v165 = vmul.f32 %v119, %v148
    %v166 = vmul.f32 %v119, %v152
    %v167 = vmul.f32 %v123, %v148
    %v168 = vmul.f32 %v123, %v152
    %v169 = vmul.f32 %v111, %v156
    %v170 = vmul.f32 %v111, %v160
    %v171 = vmul.f32 %v115, %v156
    %v172 = vmul.f32 %v115, %v160
    %v173 = vmul.f32 %v119, %v156
    %v174 = vmul.f32 %v119, %v160
    %v175 = vmul.f32 %v123, %v156
    %v176 = vmul.f32 %v123, %v160
    %v177 = vadd.f32 %v93, %v161
    %v178 = vadd.f32 %v94, %v162
    %v179 = vadd.f32 %v95, %v163
    %v180 = vadd.f32 %v96, %v164
    %v181 = vadd.f32 %v97, %v165
    %v182 = vadd.f32 %v98, %v166
    %v183 = vadd.f32 %v99, %v167
    %v184 = vadd.f32 %v100, %v168
    %v185 = vadd.f32 %v101, %v169
    %v186 = vadd.f32 %v102, %v170
    %v187 = vadd.f32 %v103, %v171
    %v188 = vadd.f32 %v104, %v172
    %v189 = vadd.f32 %v105, %v173
    %v190 = vadd.f32 %v106, %v174
    %v191 = vadd.f32 %v107, %v175
    %v192 = vadd.f32 %v108, %v176
    %193 = vset.pattern.permute.xlu0 2
    %194 = vperm.xlu0 %193, %v29
    %v195 = vpop.permute.xlu0 %194
    %197 = vset.pattern.permute.xlu0 2
    %198 = vperm.xlu0 %197, %v30
    %v199 = vpop.permute.xlu0 %198
    %201 = vset.pattern.permute.xlu0 2
    %202 = vperm.xlu0 %201, %v31
    %v203 = vpop.permute.xlu0 %202
    %205 = vset.pattern.permute.xlu0 2
    %206 = vperm.xlu0 %205, %v32
    %v207 = vpop.permute.xlu0 %206
    %v209 = vlaneseq
    %v210 = vshrl.u32 %v209, 7
    %v211 = vsub.s32 2, %v210
    %v212 = vrot.slane %v33, %v211
    %v213 = vlaneseq
    %v214 = vshrl.u32 %v213, 7
    %v215 = vsub.s32 6, %v214
    %v216 = vrot.slane %v33, %v215
    %v217 = vlaneseq
    %v218 = vshrl.u32 %v217, 7
    %v219 = vsub.s32 2, %v218
    %v220 = vrot.slane %v34, %v219
    %v221 = vlaneseq
    %v222 = vshrl.u32 %v221, 7
    %v223 = vsub.s32 6, %v222
    %v224 = vrot.slane %v34, %v223
    %v229 = vlaneseq
    %v230 = vshrl.u32 %v229, 7
    %v231 = vsub.s32 2, %v230
    %v232 = vrot.slane %v212, %v231
    %v233 = vlaneseq
    %v234 = vshrl.u32 %v233, 7
    %v235 = vsub.s32 2, %v234
    %v236 = vrot.slane %v216, %v235
    %v237 = vlaneseq
    %v238 = vshrl.u32 %v237, 7
    %v239 = vsub.s32 2, %v238
    %v240 = vrot.slane %v220, %v239
    %v241 = vlaneseq
    %v242 = vshrl.u32 %v241, 7
    %v243 = vsub.s32 2, %v242
    %v244 = vrot.slane %v224, %v243
    %v245 = vmul.f32 %v195, %v232
    %v246 = vmul.f32 %v195, %v236
    %v247 = vmul.f32 %v199, %v232
    %v248 = vmul.f32 %v199, %v236
    %v249 = vmul.f32 %v203, %v232
    %v250 = vmul.f32 %v203, %v236
    %v251 = vmul.f32 %v207, %v232
    %v252 = vmul.f32 %v207, %v236
    %v253 = vmul.f32 %v195, %v240
    %v254 = vmul.f32 %v195, %v244
    %v255 = vmul.f32 %v199, %v240
    %v256 = vmul.f32 %v199, %v244
    %v257 = vmul.f32 %v203, %v240
    %v258 = vmul.f32 %v203, %v244
    %v259 = vmul.f32 %v207, %v240
    %v260 = vmul.f32 %v207, %v244
    %v261 = vadd.f32 %v177, %v245
    %v262 = vadd.f32 %v178, %v246
    %v263 = vadd.f32 %v179, %v247
    %v264 = vadd.f32 %v180, %v248
    %v265 = vadd.f32 %v181, %v249
    %v266 = vadd.f32 %v182, %v250
    %v267 = vadd.f32 %v183, %v251
    %v268 = vadd.f32 %v184, %v252
    %v269 = vadd.f32 %v185, %v253
    %v270 = vadd.f32 %v186, %v254
    %v271 = vadd.f32 %v187, %v255
    %v272 = vadd.f32 %v188, %v256
    %v273 = vadd.f32 %v189, %v257
    %v274 = vadd.f32 %v190, %v258
    %v275 = vadd.f32 %v191, %v259
    %v276 = vadd.f32 %v192, %v260
    %277 = vset.pattern.permute.xlu0 3
    %278 = vperm.xlu0 %277, %v29
    %v279 = vpop.permute.xlu0 %278
    %281 = vset.pattern.permute.xlu0 3
    %282 = vperm.xlu0 %281, %v30
    %v283 = vpop.permute.xlu0 %282
    %285 = vset.pattern.permute.xlu0 3
    %286 = vperm.xlu0 %285, %v31
    %v287 = vpop.permute.xlu0 %286
    %289 = vset.pattern.permute.xlu0 3
    %290 = vperm.xlu0 %289, %v32
    %v291 = vpop.permute.xlu0 %290
    %v293 = vlaneseq
    %v294 = vshrl.u32 %v293, 7
    %v295 = vsub.s32 3, %v294
    %v296 = vrot.slane %v33, %v295
    %v297 = vlaneseq
    %v298 = vshrl.u32 %v297, 7
    %v299 = vsub.s32 7, %v298
    %v300 = vrot.slane %v33, %v299
    %v301 = vlaneseq
    %v302 = vshrl.u32 %v301, 7
    %v303 = vsub.s32 3, %v302
    %v304 = vrot.slane %v34, %v303
    %v305 = vlaneseq
    %v306 = vshrl.u32 %v305, 7
    %v307 = vsub.s32 7, %v306
    %v308 = vrot.slane %v34, %v307
    %v313 = vlaneseq
    %v314 = vshrl.u32 %v313, 7
    %v315 = vsub.s32 3, %v314
    %v316 = vrot.slane %v296, %v315
    %v317 = vlaneseq
    %v318 = vshrl.u32 %v317, 7
    %v319 = vsub.s32 3, %v318
    %v320 = vrot.slane %v300, %v319
    %v321 = vlaneseq
    %v322 = vshrl.u32 %v321, 7
    %v323 = vsub.s32 3, %v322
    %v324 = vrot.slane %v304, %v323
    %v325 = vlaneseq
    %v326 = vshrl.u32 %v325, 7
    %v327 = vsub.s32 3, %v326
    %v328 = vrot.slane %v308, %v327
    %v329 = vmul.f32 %v279, %v316
    %v330 = vmul.f32 %v279, %v320
    %v331 = vmul.f32 %v283, %v316
    %v332 = vmul.f32 %v283, %v320
    %v333 = vmul.f32 %v287, %v316
    %v334 = vmul.f32 %v287, %v320
    %v335 = vmul.f32 %v291, %v316
    %v336 = vmul.f32 %v291, %v320
    %v337 = vmul.f32 %v279, %v324
    %v338 = vmul.f32 %v279, %v328
    %v339 = vmul.f32 %v283, %v324
    %v340 = vmul.f32 %v283, %v328
    %v341 = vmul.f32 %v287, %v324
    %v342 = vmul.f32 %v287, %v328
    %v343 = vmul.f32 %v291, %v324
    %v344 = vmul.f32 %v291, %v328
    %v345 = vadd.f32 %v261, %v329
    %v346 = vadd.f32 %v262, %v330
    %v347 = vadd.f32 %v263, %v331
    %v348 = vadd.f32 %v264, %v332
    %v349 = vadd.f32 %v265, %v333
    %v350 = vadd.f32 %v266, %v334
    %v351 = vadd.f32 %v267, %v335
    %v352 = vadd.f32 %v268, %v336
    %v353 = vadd.f32 %v269, %v337
    %v354 = vadd.f32 %v270, %v338
    %v355 = vadd.f32 %v271, %v339
    %v356 = vadd.f32 %v272, %v340
    %v357 = vadd.f32 %v273, %v341
    %v358 = vadd.f32 %v274, %v342
    %v359 = vadd.f32 %v275, %v343
    %v360 = vadd.f32 %v276, %v344
    %v361 = vmax.f32 %v345, 0.0
    %v362 = vmax.f32 %v346, 0.0
    %v363 = vmax.f32 %v347, 0.0
    %v364 = vmax.f32 %v348, 0.0
    %v365 = vmax.f32 %v349, 0.0
    %v366 = vmax.f32 %v350, 0.0
    %v367 = vmax.f32 %v351, 0.0
    %v368 = vmax.f32 %v352, 0.0
    %v369 = vmax.f32 %v353, 0.0
    %v370 = vmax.f32 %v354, 0.0
    %v371 = vmax.f32 %v355, 0.0
    %v372 = vmax.f32 %v356, 0.0
    %v373 = vmax.f32 %v357, 0.0
    %v374 = vmax.f32 %v358, 0.0
    %v375 = vmax.f32 %v359, 0.0
    %v376 = vmax.f32 %v360, 0.0
    %v377 = vadd.f32 %v361, %v362
    %378 = vadd.xlane.f32.xlu0 %v377
    %v379 = vpop.xlane.xlu0 %378
    %v380 = vadd.f32 %v363, %v364
    %381 = vadd.xlane.f32.xlu0 %v380
    %v382 = vpop.xlane.xlu0 %381
    %v383 = vadd.f32 %v365, %v366
    %384 = vadd.xlane.f32.xlu0 %v383
    %v385 = vpop.xlane.xlu0 %384
    %v386 = vadd.f32 %v367, %v368
    %387 = vadd.xlane.f32.xlu0 %v386
    %v388 = vpop.xlane.xlu0 %387
    %v389 = vadd.f32 %v369, %v370
    %390 = vadd.xlane.f32.xlu0 %v389
    %v391 = vpop.xlane.xlu0 %390
    %v392 = vadd.f32 %v371, %v372
    %393 = vadd.xlane.f32.xlu0 %v392
    %v394 = vpop.xlane.xlu0 %393
    %v395 = vadd.f32 %v373, %v374
    %396 = vadd.xlane.f32.xlu0 %v395
    %v397 = vpop.xlane.xlu0 %396
    %v398 = vadd.f32 %v375, %v376
    %399 = vadd.xlane.f32.xlu0 %v398
    %v400 = vpop.xlane.xlu0 %399
    %v401 = vadd.f32 %v379, 0.0
    %v402 = vadd.f32 %v382, 0.0
    %v403 = vadd.f32 %v385, 0.0
    %v404 = vadd.f32 %v388, 0.0
    %v405 = vadd.f32 %v391, 0.0
    %v406 = vadd.f32 %v394, 0.0
    %v407 = vadd.f32 %v397, 0.0
    %v408 = vadd.f32 %v400, 0.0
    %v409 = vmul.f32 %v401, 0.00390625
    %v410 = vmul.f32 %v402, 0.00390625
    %v411 = vmul.f32 %v403, 0.00390625
    %v412 = vmul.f32 %v404, 0.00390625
    %v413 = vmul.f32 %v405, 0.00390625
    %v414 = vmul.f32 %v406, 0.00390625
    %v415 = vmul.f32 %v407, 0.00390625
    %v416 = vmul.f32 %v408, 0.00390625
    %v417 = vld [vmem:[#allocation2] sm:$0xff]
    %v418 = vld [vmem:[#allocation2 + $0x8] sm:$0xff]
    %v419 = vld [vmem:[#allocation2 + $0x10] sm:$0xff]
    %v420 = vld [vmem:[#allocation2 + $0x18] sm:$0xff]
    %v421 = vld [vmem:[#allocation2 + $0x20] sm:$0xff]
    %v422 = vld [vmem:[#allocation2 + $0x28] sm:$0xff]
    %v423 = vld [vmem:[#allocation2 + $0x30] sm:$0xff]
    %v424 = vld [vmem:[#allocation2 + $0x38] sm:$0xff]
    %v425 = vld [vmem:[#allocation2 + $0x40] sm:$0xff]
    %v426 = vld [vmem:[#allocation2 + $0x48] sm:$0xff]
    %v427 = vld [vmem:[#allocation2 + $0x50] sm:$0xff]
    %v428 = vld [vmem:[#allocation2 + $0x58] sm:$0xff]
    %v429 = vld [vmem:[#allocation2 + $0x60] sm:$0xff]
    %v430 = vld [vmem:[#allocation2 + $0x68] sm:$0xff]
    %v431 = vld [vmem:[#allocation2 + $0x70] sm:$0xff]
    %v432 = vld [vmem:[#allocation2 + $0x78] sm:$0xff]
    %v441 = vlaneseq
    %v442 = vand.u32 %v441, 127
    %v443 = vlaneseq
    %v444 = vshrl.u32 %v443, 7
    %v445 = vsub.s32 %v442, %v444
    %v446 = vrot.slane %v409, %v445
    %v447 = vadd.s32 %v442, 4294967288
    %v448 = vlaneseq
    %v449 = vshrl.u32 %v448, 7
    %v450 = vsub.s32 %v447, %v449
    %v451 = vrot.slane %v410, %v450
    %vm452 = vcmask 130112
    %v453 = vsel %vm452, %v451, %v446
    %v454 = vadd.s32 %v442, 4294967280
    %v455 = vlaneseq
    %v456 = vshrl.u32 %v455, 7
    %v457 = vsub.s32 %v454, %v456
    %v458 = vrot.slane %v411, %v457
    %vm459 = vcmask 195712
    %v460 = vsel %vm459, %v458, %v453
    %v461 = vadd.s32 %v442, 4294967272
    %v462 = vlaneseq
    %v463 = vshrl.u32 %v462, 7
    %v464 = vsub.s32 %v461, %v463
    %v465 = vrot.slane %v412, %v464
    %vm466 = vcmask 261312
    %v467 = vsel %vm466, %v465, %v460
    %v468 = vlaneseq
    %v469 = vshrl.u32 %v468, 7
    %v470 = vsub.s32 %v442, %v469
    %v471 = vrot.slane %v413, %v470
    %v472 = vlaneseq
    %v473 = vshrl.u32 %v472, 7
    %v474 = vsub.s32 %v447, %v473
    %v475 = vrot.slane %v414, %v474
    %v476 = vsel %vm452, %v475, %v471
    %v477 = vlaneseq
    %v478 = vshrl.u32 %v477, 7
    %v479 = vsub.s32 %v454, %v478
    %v480 = vrot.slane %v415, %v479
    %v481 = vsel %vm459, %v480, %v476
    %v482 = vlaneseq
    %v483 = vshrl.u32 %v482, 7
    %v484 = vsub.s32 %v461, %v483
    %v485 = vrot.slane %v416, %v484
    %v486 = vsel %vm466, %v485, %v481
    %vm487 = vcmask 1041409
    %v488 = vsel %vm487, %v486, %v467
    %vm489 = vcmask 261120
    %v490 = vsel %vm489, %v488, 0
    %492 = vmatprep.subr.mxu0 0.0
    %493 = vmatpush1.msra.mxu0 0.0
    %494 = vmatprep.subr.mxu0 0.0
    %495 = vmatpush1.msra.mxu0 0.0
    %496 = vmatprep.subr.mxu0 0.0
    %497 = vmatpush1.msra.mxu0 0.0
    %498 = vmatprep.subr.mxu0 0.0
    %499 = vmatpush1.msra.mxu0 0.0
    %500 = vmatprep.subr.mxu0 0.0
    %501 = vmatpush1.msra.mxu0 0.0
    %502 = vmatprep.subr.mxu0 0.0
    %503 = vmatpush1.msra.mxu0 0.0
    %504 = vmatprep.subr.mxu0 0.0
    %505 = vmatpush1.msra.mxu0 0.0
    %506 = vmatprep.subr.mxu0 0.0
    %507 = vmatpush1.msra.mxu0 0.0
    %508 = vmatprep.subr.mxu0 0.0
    %509 = vmatpush1.msra.mxu0 0.0
    %510 = vmatprep.subr.mxu0 0.0
    %511 = vmatpush1.msra.mxu0 0.0
    %512 = vmatprep.subr.mxu0 0.0
    %513 = vmatpush1.msra.mxu0 0.0
    %514 = vmatprep.subr.mxu0 0.0
    %515 = vmatpush1.msra.mxu0 0.0
    %516 = vmatprep.subr.mxu0 %v430
    %517 = vmatpush1.msra.mxu0 %v429
    %518 = vmatprep.subr.mxu0 %v426
    %519 = vmatpush1.msra.mxu0 %v425
    %520 = vmatprep.subr.mxu0 %v422
    %521 = vmatpush1.msra.mxu0 %v421
    %522 = vmatprep.subr.mxu0 %v418
    %523 = vmatpush1.msra.mxu0 %v417
    %524 = vmatprep.subr.mxu0 0.0
    %525 = vmatpush2.msra.mxu0 0.0
    %526 = vmatprep.subr.mxu0 0.0
    %527 = vmatpush2.msra.mxu0 0.0
    %528 = vmatprep.subr.mxu0 0.0
    %529 = vmatpush2.msra.mxu0 0.0
    %530 = vmatprep.subr.mxu0 0.0
    %531 = vmatpush2.msra.mxu0 0.0
    %532 = vmatprep.subr.mxu0 0.0
    %533 = vmatpush2.msra.mxu0 0.0
    %534 = vmatprep.subr.mxu0 0.0
    %535 = vmatpush2.msra.mxu0 0.0
    %536 = vmatprep.subr.mxu0 0.0
    %537 = vmatpush2.msra.mxu0 0.0
    %538 = vmatprep.subr.mxu0 0.0
    %539 = vmatpush2.msra.mxu0 0.0
    %540 = vmatprep.subr.mxu0 0.0
    %541 = vmatpush2.msra.mxu0 0.0
    %542 = vmatprep.subr.mxu0 0.0
    %543 = vmatpush2.msra.mxu0 0.0
    %544 = vmatprep.subr.mxu0 0.0
    %545 = vmatpush2.msra.mxu0 0.0
    %546 = vmatprep.subr.mxu0 0.0
    %547 = vmatpush2.msra.mxu0 0.0
    %548 = vmatprep.subr.mxu0 0.0
    %549 = vmatpush2.msra.mxu0 0.0
    %550 = vmatprep.subr.mxu0 0.0
    %551 = vmatpush2.msra.mxu0 0.0
    %552 = vmatprep.subr.mxu0 0.0
    %553 = vmatpush2.msra.mxu0 0.0
    %554 = vmatprep.subr.mxu0 0.0
    %555 = vmatpush2.msra.mxu0 0.0
    %556 = vmatprep.mubr.f32.mxu0 0.0
    %557 = vmatmul.mubr.f32.gmra.mxu0 %v490
    %v558 = vpop.f32.mrf.mxu0
    %v559 = vadd.f32 0.0, %v558
    %v560 = vpop.f32.mrf.mxu0
    %v561 = vadd.f32 0.0, %v560
    %562 = vdwg.mxu0
    %563 = vmatprep.subr.mxu0 0.0
    %564 = vmatpush1.msra.mxu0 0.0
    %565 = vmatprep.subr.mxu0 0.0
    %566 = vmatpush1.msra.mxu0 0.0
    %567 = vmatprep.subr.mxu0 0.0
    %568 = vmatpush1.msra.mxu0 0.0
    %569 = vmatprep.subr.mxu0 0.0
    %570 = vmatpush1.msra.mxu0 0.0
    %571 = vmatprep.subr.mxu0 0.0
    %572 = vmatpush1.msra.mxu0 0.0
    %573 = vmatprep.subr.mxu0 0.0
    %574 = vmatpush1.msra.mxu0 0.0
    %575 = vmatprep.subr.mxu0 0.0
    %576 = vmatpush1.msra.mxu0 0.0
    %577 = vmatprep.subr.mxu0 0.0
    %578 = vmatpush1.msra.mxu0 0.0
    %579 = vmatprep.subr.mxu0 0.0
    %580 = vmatpush1.msra.mxu0 0.0
    %581 = vmatprep.subr.mxu0 0.0
    %582 = vmatpush1.msra.mxu0 0.0
    %583 = vmatprep.subr.mxu0 0.0
    %584 = vmatpush1.msra.mxu0 0.0
    %585 = vmatprep.subr.mxu0 0.0
    %586 = vmatpush1.msra.mxu0 0.0
    %587 = vmatprep.subr.mxu0 %v432
    %588 = vmatpush1.msra.mxu0 %v431
    %589 = vmatprep.subr.mxu0 %v428
    %590 = vmatpush1.msra.mxu0 %v427
    %591 = vmatprep.subr.mxu0 %v424
    %592 = vmatpush1.msra.mxu0 %v423
    %593 = vmatprep.subr.mxu0 %v420
    %594 = vmatpush1.msra.mxu0 %v419
    %595 = vmatprep.subr.mxu0 0.0
    %596 = vmatpush2.msra.mxu0 0.0
    %597 = vmatprep.subr.mxu0 0.0
    %598 = vmatpush2.msra.mxu0 0.0
    %599 = vmatprep.subr.mxu0 0.0
    %600 = vmatpush2.msra.mxu0 0.0
    %601 = vmatprep.subr.mxu0 0.0
    %602 = vmatpush2.msra.mxu0 0.0
    %603 = vmatprep.subr.mxu0 0.0
    %604 = vmatpush2.msra.mxu0 0.0
    %605 = vmatprep.subr.mxu0 0.0
    %606 = vmatpush2.msra.mxu0 0.0
    %607 = vmatprep.subr.mxu0 0.0
    %608 = vmatpush2.msra.mxu0 0.0
    %609 = vmatprep.subr.mxu0 0.0
    %610 = vmatpush2.msra.mxu0 0.0
    %611 = vmatprep.subr.mxu0 0.0
    %612 = vmatpush2.msra.mxu0 0.0
    %613 = vmatprep.subr.mxu0 0.0
    %614 = vmatpush2.msra.mxu0 0.0
    %615 = vmatprep.subr.mxu0 0.0
    %616 = vmatpush2.msra.mxu0 0.0
    %617 = vmatprep.subr.mxu0 0.0
    %618 = vmatpush2.msra.mxu0 0.0
    %619 = vmatprep.subr.mxu0 0.0
    %620 = vmatpush2.msra.mxu0 0.0
    %621 = vmatprep.subr.mxu0 0.0
    %622 = vmatpush2.msra.mxu0 0.0
    %623 = vmatprep.subr.mxu0 0.0
    %624 = vmatpush2.msra.mxu0 0.0
    %625 = vmatprep.subr.mxu0 0.0
    %626 = vmatpush2.msra.mxu0 0.0
    %627 = vmatprep.mubr.f32.mxu0 0.0
    %628 = vmatmul.mubr.f32.gmra.mxu0 %v490
    %v629 = vpop.f32.mrf.mxu0
    %v630 = vadd.f32 0.0, %v629
    %v631 = vpop.f32.mrf.mxu0
    %v632 = vadd.f32 0.0, %v631
    %633 = vdwg.mxu0
    %v638 = vcombine.low %v559, %v561
    %v639 = vcombine.low %v630, %v632
    %v641 = vunpack.c.l.s4 1983009808
    %v642 = vunpack.c.0.s8 %v641
    %v643 = vlaneseq
    %v644 = vshrl.u32 %v643, 7
    %v645 = vsub.s32 %v642, %v644
    %v646 = vrot.slane %v638, %v645
    %v648 = vunpack.c.l.s4 1983009808
    %v649 = vunpack.c.0.s8 %v648
    %v650 = vlaneseq
    %v651 = vshrl.u32 %v650, 7
    %v652 = vsub.s32 %v649, %v651
    %v653 = vrot.slane %v639, %v652
    %v654 = vcombine.low %v646, %v653
    %656 = vst [vmem:[#allocation5] sm:$0xff] %v654
    // Predicated region
    $region18: #{tpu_custom_call.1} parent=1 // pred_check
      _
    $region19: #{tpu_custom_call.1} parent=1 // pred_check_branch
      %658 = sbr.rel (0) target = $region21
    $region20: #{tpu_custom_call.1} parent=1 // pred_region
      %s660 = ssub.s32 128, 128
      %661 = vsyncadd [#allocation4], %s660
      %s663 = sshll.u32 [#allocation5], 4
      %s664 = int_to_ptr.vmem [resolvable:$true] %s663
      %666 = dma.vmem_to_hbm [thread:$0]  %s664, 128, %s3, [#allocation4]
    $region21: #{tpu_custom_call.1} parent=1 // pred_fallthru
      _
    // Predicated region
    $region22: #{tpu_custom_call.1} parent=1 // pred_check
      _
    $region23: #{tpu_custom_call.1} parent=1 // pred_check_branch
      %668 = sbr.rel (0) target = $region25
    $region24: #{tpu_custom_call.1} parent=1 // pred_region
      %669 = dma.done [#allocation4], 128
    $region25: #{tpu_custom_call.1} parent=1 // pred_fallthru
      _
    %670 = vsyncpa [#allocation3], 1
    %671 = vsyncpa [#allocation4], 1

</llo_original>
